<compile_context>
chip_gen: v7x
topology: tpu7x:2x2x1
jax: 0.10.0
libtpu: 0.0.40
codegen_flags: <defaults>
</compile_context>

<pallas_src>
import functools

import jax
import jax.numpy as jnp
import numpy as np
from jax.experimental import pallas as pl
from jax.experimental.pallas import tpu as pltpu


def _mha_kernel(xq_ref, xk_ref, xv_ref,
                wq_ref, wk_ref, wv_ref, wh_ref, bh_ref,
                h_ref, *rest, compute_dtype, with_attn):
    if with_attn:
        a_ref, acc_ref = rest
    else:
        (acc_ref,) = rest

    head = pl.program_id(1)
    cd = compute_dtype

    xq = xq_ref[0].astype(cd)            # (S, d_xq)
    xk = xk_ref[0].astype(cd)            # (S, d_xk)
    xv = xv_ref[0].astype(cd)            # (S, d_xv)

    # Per-head projections.  Weights were pre-transposed (and the q scale
    # folded) in the wrapper, so these are plain (S, d_in) @ (d_in, d_k) MXU
    # matmuls with f32 accumulation -- no in-kernel transpose or lane slicing.
    qh = jnp.dot(xq, wq_ref[0], preferred_element_type=jnp.float32)   # (S, d_k)
    kh = jnp.dot(xk, wk_ref[0], preferred_element_type=jnp.float32)   # (S, d_k)
    vh = jnp.dot(xv, wv_ref[0], preferred_element_type=jnp.float32)   # (S, d_k)

    # scores = qh @ kh.T without materializing a transpose: contract d_k of both.
    scores = jax.lax.dot_general(
        qh.astype(cd), kh.astype(cd),
        dimension_numbers=(((1,), (1,)), ((), ())),
        preferred_element_type=jnp.float32)                            # (S, S)

    # Numerically stable softmax in f32.
    m = jnp.max(scores, axis=-1, keepdims=True)
    e = jnp.exp(scores - m)
    denom = jnp.sum(e, axis=-1, keepdims=True)
    # Exact reciprocal when the attention weights are emitted; EUP-approx
    # (effectively free next to the VPU) when only h is needed.
    attn = e * pl.reciprocal(denom, approx=not with_attn)               # (S, S)

    if with_attn:
        a_ref[0, 0] = attn

    # Per-head attention output and its contribution to the output projection.
    o_h = jnp.dot(attn.astype(cd), vh.astype(cd),
                  preferred_element_type=jnp.float32)                   # (S, d_k)
    contrib = jnp.dot(o_h.astype(cd), wh_ref[0],
                      preferred_element_type=jnp.float32)               # (S, D)

    @pl.when(head == 0)
    def _init():
        # Bias folded into the accumulator init -> finalize is just cast+store.
        acc_ref[...] = jnp.broadcast_to(bh_ref[...], acc_ref.shape)

    acc_ref[...] += contrib

    @pl.when(head == pl.num_programs(1) - 1)
    def _finalize():
        h_ref[0] = acc_ref[...].astype(h_ref.dtype)


def multi_head_attention(x_q, x_k, x_v, params, *, num_heads,
                         compute_dtype=jnp.bfloat16, return_attn=True):
    """params: w_q/w_k/w_v (D, d_in) and w_h (D, D), b_h (D,) in PyTorch
    Linear layout (out, in).  Returns (h, a) like the module, or h only if
    return_attn=False (skips the B*H*S^2 attention-weights writeback)."""
    B, S, _ = x_q.shape
    D = params["w_q"].shape[0]
    H = num_heads
    assert D % H == 0
    d_k = D // H

    d_xq = params["w_q"].shape[1]
    d_xk = params["w_k"].shape[1]
    d_xv = params["w_v"].shape[1]

    scale = float(1.0 / np.sqrt(d_k))

    def per_head(w, d_in):
        # (D, d_in) -> W.T (d_in, D) -> (d_in, H, d_k) -> (H, d_in, d_k)
        return jnp.transpose(w.T.reshape(d_in, H, d_k), (1, 0, 2)).astype(compute_dtype)

    # One-time, wrapper-side weight prep (transpose + per-head reslice + cast;
    # q scale folded into w_q).  Done by XLA once, not B*H times in the kernel.
    wq_t = per_head(params["w_q"] * scale, d_xq)          # (H, d_xq, d_k)
    wk_t = per_head(params["w_k"], d_xk)                  # (H, d_xk, d_k)
    wv_t = per_head(params["w_v"], d_xv)                  # (H, d_xv, d_k)
    wh_t = params["w_h"].T.reshape(H, d_k, D).astype(compute_dtype)   # (H, d_k, D)
    b_h = params["b_h"].reshape(1, D).astype(jnp.float32)

    kernel = functools.partial(_mha_kernel, compute_dtype=compute_dtype,
                               with_attn=return_attn)

    out_shape = [jax.ShapeDtypeStruct((B, S, D), jnp.float32)]
    out_specs = [pl.BlockSpec((1, S, D), lambda b, h: (b, 0, 0))]
    if return_attn:
        out_shape.append(jax.ShapeDtypeStruct((B, H, S, S), jnp.float32))
        # Attention weights tiled per head: (1, 1, S, S) block, not (1, H, S, S).
        out_specs.append(pl.BlockSpec((1, 1, S, S), lambda b, h: (b, h, 0, 0)))

    outs = pl.pallas_call(
        kernel,
        out_shape=tuple(out_shape),
        grid_spec=pltpu.PrefetchScalarGridSpec(
            num_scalar_prefetch=0,
            grid=(B, H),
            in_specs=[
                pl.BlockSpec((1, S, d_xq), lambda b, h: (b, 0, 0)),
                pl.BlockSpec((1, S, d_xk), lambda b, h: (b, 0, 0)),
                pl.BlockSpec((1, S, d_xv), lambda b, h: (b, 0, 0)),
                pl.BlockSpec((1, d_xq, d_k), lambda b, h: (h, 0, 0)),
                pl.BlockSpec((1, d_xk, d_k), lambda b, h: (h, 0, 0)),
                pl.BlockSpec((1, d_xv, d_k), lambda b, h: (h, 0, 0)),
                pl.BlockSpec((1, d_k, D), lambda b, h: (h, 0, 0)),
                pl.BlockSpec((1, D), lambda b, h: (0, 0)),
            ],
            out_specs=tuple(out_specs),
            scratch_shapes=[pltpu.VMEM((S, D), jnp.float32)],
        ),
        # Head axis accumulates into the h output -> must be "arbitrary" (and last).
        compiler_params=pltpu.CompilerParams(
            dimension_semantics=("parallel", "arbitrary")),
    )(x_q, x_k, x_v, wq_t, wk_t, wv_t, wh_t, b_h)

    if return_attn:
        h, a = outs
        return h, a
    (h,) = outs
    return h


def _reference(x_q, x_k, x_v, params, *, num_heads):
    """Pure-JAX f32 reference matching the PyTorch module exactly."""
    B, S, _ = x_q.shape
    D = params["w_q"].shape[0]
    d_k = D // num_heads

    def split(x):
        return x.reshape(B, S, num_heads, d_k).transpose(0, 2, 1, 3)

    q = split(x_q @ params["w_q"].T) / np.sqrt(d_k)
    k = split(x_k @ params["w_k"].T)
    v = split(x_v @ params["w_v"].T)
    scores = jnp.einsum("bhqd,bhkd->bhqk", q, k)
    a = jax.nn.softmax(scores, axis=-1)
    h = jnp.einsum("bhqk,bhkd->bhqd", a, v)
    h_cat = h.transpose(0, 2, 1, 3).reshape(B, S, D)
    out = h_cat @ params["w_h"].T + params["b_h"]
    return out, a


if __name__ == "__main__":
    # Small shapes consistent with the module's forward.
    B, S = 2, 8
    d_model, num_heads = 32, 2

    key = jax.random.PRNGKey(0)
    k1, k2, k3, k4, k5, k6, k7, k8 = jax.random.split(key, 8)

    x_q = jax.random.normal(k1, (B, S, d_model), dtype=jnp.float32)
    x_k = jax.random.normal(k2, (B, S, d_model), dtype=jnp.float32)
    x_v = jax.random.normal(k3, (B, S, d_model), dtype=jnp.float32)

    # Deterministic synthetic parameters (PyTorch Linear weight layout: (out, in)).
    scale = 1.0 / np.sqrt(d_model)
    params = {
        "w_q": jax.random.uniform(k4, (d_model, d_model), jnp.float32, -scale, scale),
        "w_k": jax.random.uniform(k5, (d_model, d_model), jnp.float32, -scale, scale),
        "w_v": jax.random.uniform(k6, (d_model, d_model), jnp.float32, -scale, scale),
        "w_h": jax.random.uniform(k7, (d_model, d_model), jnp.float32, -scale, scale),
        "b_h": jax.random.uniform(k8, (d_model,), jnp.float32, -scale, scale),
    }

    h_ref, a_ref = _reference(x_q, x_k, x_v, params, num_heads=num_heads)

    # Default (bf16 matmul inputs, f32 accumulation / softmax).
    h, a = multi_head_attention(x_q, x_k, x_v, params, num_heads=num_heads)
    jax.block_until_ready((h, a))
    np.testing.assert_allclose(np.asarray(h), np.asarray(h_ref), rtol=2e-2, atol=2e-2)
    np.testing.assert_allclose(np.asarray(a), np.asarray(a_ref), rtol=2e-2, atol=2e-2)

    # Full-f32 compute path: matches the reference tightly.
    h32, a32 = multi_head_attention(x_q, x_k, x_v, params, num_heads=num_heads,
                                    compute_dtype=jnp.float32)
    jax.block_until_ready((h32, a32))
    np.testing.assert_allclose(np.asarray(h32), np.asarray(h_ref), rtol=1e-5, atol=1e-5)
    np.testing.assert_allclose(np.asarray(a32), np.asarray(a_ref), rtol=1e-5, atol=1e-5)

    # h-only path (skips the attention-weights HBM writeback, approx reciprocal).
    h_only = multi_head_attention(x_q, x_k, x_v, params, num_heads=num_heads,
                                  return_attn=False)
    jax.block_until_ready(h_only)
    np.testing.assert_allclose(np.asarray(h_only), np.asarray(h_ref),
                               rtol=5e-2, atol=5e-2)

    print("KERNEL_OK")
</pallas_src>

<mosaic_0001>
module attributes {stable_mosaic.version = 11 : i64} {
  func.func @_mha_kernel(%arg0: i32, %arg1: i32, %arg2: memref<1x8x32xf32, #tpu.memory_space<vmem>>, %arg3: memref<1x8x32xf32, #tpu.memory_space<vmem>>, %arg4: memref<1x8x32xf32, #tpu.memory_space<vmem>>, %arg5: memref<1x32x16xbf16, #tpu.memory_space<vmem>>, %arg6: memref<1x32x16xbf16, #tpu.memory_space<vmem>>, %arg7: memref<1x32x16xbf16, #tpu.memory_space<vmem>>, %arg8: memref<1x16x32xbf16, #tpu.memory_space<vmem>>, %arg9: memref<1x32xf32, #tpu.memory_space<vmem>>, %arg10: memref<1x8x32xf32, #tpu.memory_space<vmem>>, %arg11: memref<1x1x8x8xf32, #tpu.memory_space<vmem>>, %arg12: memref<8x32xf32, #tpu.memory_space<vmem>>) attributes {dimension_semantics = [#tpu.dimension_semantics<parallel>, #tpu.dimension_semantics<arbitrary>], iteration_bounds = array<i64: 2, 2>, scalar_prefetch = 0 : i64, scratch_operands = 1 : i64, tpu.core_type = #tpu.core_type<tc>, window_params = [{transform_indices = @transform_0, window_bounds = array<i64: 1, 8, 32>}, {transform_indices = @transform_1, window_bounds = array<i64: 1, 8, 32>}, {transform_indices = @transform_2, window_bounds = array<i64: 1, 8, 32>}, {transform_indices = @transform_3, window_bounds = array<i64: 1, 32, 16>}, {transform_indices = @transform_4, window_bounds = array<i64: 1, 32, 16>}, {transform_indices = @transform_5, window_bounds = array<i64: 1, 32, 16>}, {transform_indices = @transform_6, window_bounds = array<i64: 1, 16, 32>}, {pipeline_mode = #tpu.pipeline_mode<synchronous>, transform_indices = @transform_7, window_bounds = array<i64: 1, 32>}, {transform_indices = @transform_8, window_bounds = array<i64: 1, 8, 32>}, {transform_indices = @transform_9, window_bounds = array<i64: 1, 1, 8, 8>}]} {
    %c0 = arith.constant 0 : index
    %c0_0 = arith.constant 0 : index
    %c0_1 = arith.constant 0 : index
    %0 = vector.load %arg2[%c0, %c0_0, %c0_1] : memref<1x8x32xf32, #tpu.memory_space<vmem>>, vector<1x8x32xf32>
    %1 = vector.shape_cast %0 : vector<1x8x32xf32> to vector<8x32xf32>
    %2 = arith.truncf %1 : vector<8x32xf32> to vector<8x32xbf16>
    %c0_2 = arith.constant 0 : index
    %c0_3 = arith.constant 0 : index
    %c0_4 = arith.constant 0 : index
    %3 = vector.load %arg3[%c0_2, %c0_3, %c0_4] : memref<1x8x32xf32, #tpu.memory_space<vmem>>, vector<1x8x32xf32>
    %4 = vector.shape_cast %3 : vector<1x8x32xf32> to vector<8x32xf32>
    %5 = arith.truncf %4 : vector<8x32xf32> to vector<8x32xbf16>
    %c0_5 = arith.constant 0 : index
    %c0_6 = arith.constant 0 : index
    %c0_7 = arith.constant 0 : index
    %6 = vector.load %arg4[%c0_5, %c0_6, %c0_7] : memref<1x8x32xf32, #tpu.memory_space<vmem>>, vector<1x8x32xf32>
    %7 = vector.shape_cast %6 : vector<1x8x32xf32> to vector<8x32xf32>
    %8 = arith.truncf %7 : vector<8x32xf32> to vector<8x32xbf16>
    %c0_8 = arith.constant 0 : index
    %c0_9 = arith.constant 0 : index
    %c0_10 = arith.constant 0 : index
    %9 = vector.load %arg5[%c0_8, %c0_9, %c0_10] : memref<1x32x16xbf16, #tpu.memory_space<vmem>>, vector<1x32x16xbf16>
    %10 = vector.shape_cast %9 : vector<1x32x16xbf16> to vector<32x16xbf16>
    %cst = arith.constant dense<0.000000e+00> : vector<8x16xf32>
    %11 = tpu.matmul %2, %10, %cst {dimension_numbers = #tpu.dot_dimension_numbers<[1], [0], [0], [1], [0, 0, 1, 1], [], []>} : vector<8x32xbf16>, vector<32x16xbf16>, vector<8x16xf32> -> vector<8x16xf32>
    %c0_11 = arith.constant 0 : index
    %c0_12 = arith.constant 0 : index
    %c0_13 = arith.constant 0 : index
    %12 = vector.load %arg6[%c0_11, %c0_12, %c0_13] : memref<1x32x16xbf16, #tpu.memory_space<vmem>>, vector<1x32x16xbf16>
    %13 = vector.shape_cast %12 : vector<1x32x16xbf16> to vector<32x16xbf16>
    %cst_14 = arith.constant dense<0.000000e+00> : vector<8x16xf32>
    %14 = tpu.matmul %5, %13, %cst_14 {dimension_numbers = #tpu.dot_dimension_numbers<[1], [0], [0], [1], [0, 0, 1, 1], [], []>} : vector<8x32xbf16>, vector<32x16xbf16>, vector<8x16xf32> -> vector<8x16xf32>
    %c0_15 = arith.constant 0 : index
    %c0_16 = arith.constant 0 : index
    %c0_17 = arith.constant 0 : index
    %15 = vector.load %arg7[%c0_15, %c0_16, %c0_17] : memref<1x32x16xbf16, #tpu.memory_space<vmem>>, vector<1x32x16xbf16>
    %16 = vector.shape_cast %15 : vector<1x32x16xbf16> to vector<32x16xbf16>
    %cst_18 = arith.constant dense<0.000000e+00> : vector<8x16xf32>
    %17 = tpu.matmul %8, %16, %cst_18 {dimension_numbers = #tpu.dot_dimension_numbers<[1], [0], [0], [1], [0, 0, 1, 1], [], []>} : vector<8x32xbf16>, vector<32x16xbf16>, vector<8x16xf32> -> vector<8x16xf32>
    %18 = arith.truncf %11 : vector<8x16xf32> to vector<8x16xbf16>
    %19 = arith.truncf %14 : vector<8x16xf32> to vector<8x16xbf16>
    %cst_19 = arith.constant dense<0.000000e+00> : vector<8x8xf32>
    %20 = tpu.matmul %18, %19, %cst_19 {dimension_numbers = #tpu.dot_dimension_numbers<[1], [1], [0], [0], [0, 0, 1, 0], [], []>} : vector<8x16xbf16>, vector<8x16xbf16>, vector<8x8xf32> -> vector<8x8xf32>
    %cst_20 = arith.constant dense<0xFF800000> : vector<8xf32>
    %21 = vector.multi_reduction <maximumf>, %20, %cst_20 [1] : vector<8x8xf32> to vector<8xf32>
    %22 = vector.shape_cast %21 : vector<8xf32> to vector<8x1xf32>
    %23 = vector.broadcast %22 : vector<8x1xf32> to vector<8x8xf32>
    %24 = arith.subf %20, %23 : vector<8x8xf32>
    %25 = math.exp %24 : vector<8x8xf32>
    %cst_21 = arith.constant dense<0.000000e+00> : vector<8xf32>
    %26 = vector.multi_reduction <add>, %25, %cst_21 [1] : vector<8x8xf32> to vector<8xf32>
    %27 = vector.shape_cast %26 : vector<8xf32> to vector<8x1xf32>
    %28 = tpu.reciprocal %27 : vector<8x1xf32> -> vector<8x1xf32>
    %29 = vector.broadcast %28 : vector<8x1xf32> to vector<8x8xf32>
    %30 = arith.mulf %25, %29 : vector<8x8xf32>
    %c0_22 = arith.constant 0 : index
    %c0_23 = arith.constant 0 : index
    %c0_24 = arith.constant 0 : index
    %c0_25 = arith.constant 0 : index
    %31 = vector.load %arg11[%c0_22, %c0_23, %c0_24, %c0_25] : memref<1x1x8x8xf32, #tpu.memory_space<vmem>>, vector<1x1x8x8xf32>
    %32 = vector.shape_cast %31 : vector<1x1x8x8xf32> to vector<8x8xf32>
    %33 = vector.shape_cast %30 : vector<8x8xf32> to vector<1x1x8x8xf32>
    tpu.vector_store %arg11[%c0_22, %c0_23, %c0_24, %c0_25], %33 {strides = array<i32>} : memref<1x1x8x8xf32, #tpu.memory_space<vmem>>, vector<1x1x8x8xf32>,
    %34 = arith.truncf %30 : vector<8x8xf32> to vector<8x8xbf16>
    %35 = arith.truncf %17 : vector<8x16xf32> to vector<8x16xbf16>
    %cst_26 = arith.constant dense<0.000000e+00> : vector<8x16xf32>
    %36 = tpu.matmul %34, %35, %cst_26 {dimension_numbers = #tpu.dot_dimension_numbers<[1], [0], [0], [1], [0, 0, 1, 1], [], []>} : vector<8x8xbf16>, vector<8x16xbf16>, vector<8x16xf32> -> vector<8x16xf32>
    %37 = arith.truncf %36 : vector<8x16xf32> to vector<8x16xbf16>
    %c0_27 = arith.constant 0 : index
    %c0_28 = arith.constant 0 : index
    %c0_29 = arith.constant 0 : index
    %38 = vector.load %arg8[%c0_27, %c0_28, %c0_29] : memref<1x16x32xbf16, #tpu.memory_space<vmem>>, vector<1x16x32xbf16>
    %39 = vector.shape_cast %38 : vector<1x16x32xbf16> to vector<16x32xbf16>
    %cst_30 = arith.constant dense<0.000000e+00> : vector<8x32xf32>
    %40 = tpu.matmul %37, %39, %cst_30 {dimension_numbers = #tpu.dot_dimension_numbers<[1], [0], [0], [1], [0, 0, 1, 1], [], []>} : vector<8x16xbf16>, vector<16x32xbf16>, vector<8x32xf32> -> vector<8x32xf32>
    %c0_i32 = arith.constant 0 : i32
    %41 = arith.cmpi eq, %arg1, %c0_i32 : i32
    %42 = arith.extui %41 : i1 to i32
    %c0_i32_31 = arith.constant 0 : i32
    %43 = arith.cmpi ne, %42, %c0_i32_31 : i32
    scf.if %43 {
      %c0_37 = arith.constant 0 : index
      %c0_38 = arith.constant 0 : index
      %50 = vector.load %arg9[%c0_37, %c0_38] : memref<1x32xf32, #tpu.memory_space<vmem>>, vector<1x32xf32>
      %51 = vector.shape_cast %50 : vector<1x32xf32> to vector<1x32xf32>
      %52 = vector.broadcast %51 : vector<1x32xf32> to vector<8x32xf32>
      %c0_39 = arith.constant 0 : index
      %c0_40 = arith.constant 0 : index
      %53 = vector.load %arg12[%c0_39, %c0_40] : memref<8x32xf32, #tpu.memory_space<vmem>>, vector<8x32xf32>
      tpu.vector_store %arg12[%c0_39, %c0_40], %52 {strides = array<i32>} : memref<8x32xf32, #tpu.memory_space<vmem>>, vector<8x32xf32>,
    } else {
    }
    %c0_32 = arith.constant 0 : index
    %c0_33 = arith.constant 0 : index
    %44 = vector.load %arg12[%c0_32, %c0_33] : memref<8x32xf32, #tpu.memory_space<vmem>>, vector<8x32xf32>
    %45 = arith.addf %44, %40 : vector<8x32xf32>
    %c0_34 = arith.constant 0 : index
    %c0_35 = arith.constant 0 : index
    %46 = vector.load %arg12[%c0_34, %c0_35] : memref<8x32xf32, #tpu.memory_space<vmem>>, vector<8x32xf32>
    tpu.vector_store %arg12[%c0_34, %c0_35], %45 {strides = array<i32>} : memref<8x32xf32, #tpu.memory_space<vmem>>, vector<8x32xf32>,
    %c1_i32 = arith.constant 1 : i32
    %47 = arith.cmpi eq, %arg1, %c1_i32 : i32
    %48 = arith.extui %47 : i1 to i32
    %c0_i32_36 = arith.constant 0 : i32
    %49 = arith.cmpi ne, %48, %c0_i32_36 : i32
    scf.if %49 {
      %c0_37 = arith.constant 0 : index
      %c0_38 = arith.constant 0 : index
      %50 = vector.load %arg12[%c0_37, %c0_38] : memref<8x32xf32, #tpu.memory_space<vmem>>, vector<8x32xf32>
      %c0_39 = arith.constant 0 : index
      %c0_40 = arith.constant 0 : index
      %c0_41 = arith.constant 0 : index
      %51 = vector.load %arg10[%c0_39, %c0_40, %c0_41] : memref<1x8x32xf32, #tpu.memory_space<vmem>>, vector<1x8x32xf32>
      %52 = vector.shape_cast %51 : vector<1x8x32xf32> to vector<8x32xf32>
      %53 = vector.shape_cast %50 : vector<8x32xf32> to vector<1x8x32xf32>
      tpu.vector_store %arg10[%c0_39, %c0_40, %c0_41], %53 {strides = array<i32>} : memref<1x8x32xf32, #tpu.memory_space<vmem>>, vector<1x8x32xf32>,
    } else {
    }
    return
  }
  func.func @transform_0(%arg0: i32, %arg1: i32) -> (i32, i32, i32) {
    %c0_i32 = arith.constant 0 : i32
    %c0_i32_0 = arith.constant 0 : i32
    %c0_i32_1 = arith.constant 0 : i32
    return %arg0, %c0_i32, %c0_i32_0 : i32, i32, i32
  }
  func.func @transform_1(%arg0: i32, %arg1: i32) -> (i32, i32, i32) {
    %c0_i32 = arith.constant 0 : i32
    %c0_i32_0 = arith.constant 0 : i32
    %c0_i32_1 = arith.constant 0 : i32
    return %arg0, %c0_i32, %c0_i32_0 : i32, i32, i32
  }
  func.func @transform_2(%arg0: i32, %arg1: i32) -> (i32, i32, i32) {
    %c0_i32 = arith.constant 0 : i32
    %c0_i32_0 = arith.constant 0 : i32
    %c0_i32_1 = arith.constant 0 : i32
    return %arg0, %c0_i32, %c0_i32_0 : i32, i32, i32
  }
  func.func @transform_3(%arg0: i32, %arg1: i32) -> (i32, i32, i32) {
    %c0_i32 = arith.constant 0 : i32
    %c0_i32_0 = arith.constant 0 : i32
    %c0_i32_1 = arith.constant 0 : i32
    return %arg1, %c0_i32, %c0_i32_0 : i32, i32, i32
  }
  func.func @transform_4(%arg0: i32, %arg1: i32) -> (i32, i32, i32) {
    %c0_i32 = arith.constant 0 : i32
    %c0_i32_0 = arith.constant 0 : i32
    %c0_i32_1 = arith.constant 0 : i32
    return %arg1, %c0_i32, %c0_i32_0 : i32, i32, i32
  }
  func.func @transform_5(%arg0: i32, %arg1: i32) -> (i32, i32, i32) {
    %c0_i32 = arith.constant 0 : i32
    %c0_i32_0 = arith.constant 0 : i32
    %c0_i32_1 = arith.constant 0 : i32
    return %arg1, %c0_i32, %c0_i32_0 : i32, i32, i32
  }
  func.func @transform_6(%arg0: i32, %arg1: i32) -> (i32, i32, i32) {
    %c0_i32 = arith.constant 0 : i32
    %c0_i32_0 = arith.constant 0 : i32
    %c0_i32_1 = arith.constant 0 : i32
    return %arg1, %c0_i32, %c0_i32_0 : i32, i32, i32
  }
  func.func @transform_7(%arg0: i32, %arg1: i32) -> (i32, i32) {
    %c0_i32 = arith.constant 0 : i32
    %c0_i32_0 = arith.constant 0 : i32
    %c0_i32_1 = arith.constant 0 : i32
    return %c0_i32, %c0_i32_0 : i32, i32
  }
  func.func @transform_8(%arg0: i32, %arg1: i32) -> (i32, i32, i32) {
    %c0_i32 = arith.constant 0 : i32
    %c0_i32_0 = arith.constant 0 : i32
    %c0_i32_1 = arith.constant 0 : i32
    return %arg0, %c0_i32, %c0_i32_0 : i32, i32, i32
  }
  func.func @transform_9(%arg0: i32, %arg1: i32) -> (i32, i32, i32, i32) {
    %c0_i32 = arith.constant 0 : i32
    %c0_i32_0 = arith.constant 0 : i32
    %c0_i32_1 = arith.constant 0 : i32
    return %arg0, %arg1, %c0_i32, %c0_i32_0 : i32, i32, i32, i32
  }
}

</mosaic_0001>

<llo_original>
// kernel: tpu_custom_call.1
$region0: #{tpu_custom_call.1}
  #allocation0 [shape = 'u32[]', space=smem, size = 0x4, offset = 0x4, fixed_abs, tag = 'smem constant byte address 0x4 - core index']
  #allocation1 [shape = 'u32[144,128]{1,0:T(1,128)}', space=vmem, size = 0x12000, scoped, tag = 'internal scratch']
  #allocation2 [shape = 'f32[8,32]{1,0:T(8,128)}', space=vmem, size = 0x1000, scoped, tag = 'scratch operand']
  %s0 = inlined_call_operand.vmem [shape: f32[2,8,32], index: 0, kind: input, shape index: {}]
  %s1 = inlined_call_operand.vmem [shape: f32[2,8,32], index: 1, kind: input, shape index: {}]
  %s2 = inlined_call_operand.vmem [shape: f32[2,8,32], index: 2, kind: input, shape index: {}]
  %s3 = inlined_call_operand.vmem [shape: bf16[2,32,16], index: 3, kind: input, shape index: {}]
  %s4 = inlined_call_operand.vmem [shape: bf16[2,32,16], index: 4, kind: input, shape index: {}]
  %s5 = inlined_call_operand.vmem [shape: bf16[2,32,16], index: 5, kind: input, shape index: {}]
  %s6 = inlined_call_operand.vmem [shape: bf16[2,16,32], index: 6, kind: input, shape index: {}]
  %s7 = inlined_call_operand.vmem [shape: f32[1,32], index: 7, kind: input, shape index: {}]
  %s8 = inlined_call_operand.hbm [shape: f32[2,8,32], index: 8, kind: output, shape index: {0}]
  %s9 = inlined_call_operand.hbm [shape: f32[2,2,8,8], index: 9, kind: output, shape index: {1}]
  %10 = xla_tuple %s8, %s9
  %s11 = sld [smem:[#allocation0]]
  $region81: #{tpu_custom_call.1} parent=0
    _
  %s13 = ssub.s32 1, %s11
  %s14 = scalar_select 0, %s13, %s11
  $region1: #{tpu_custom_call.1} parent=0
    #allocation3 [shape = 'u8[8192]{0}', space=vmem, size = 0x2000, scoped, tag = 'output window, operand 0']
    #allocation4 [shape = 's32[2]{0}', space=sflag, size = 0x8, scoped, tag = 'scoped memory for tpu_custom_call.1']
    #allocation5 [shape = 'u8[8192]{0}', space=vmem, size = 0x2000, scoped, tag = 'output window, operand 1']
    #allocation6 [shape = 's32[2]{0}', space=sflag, size = 0x8, scoped, tag = 'scoped memory for tpu_custom_call.1']
    %15 = vsyncpa [#allocation4], 0
    %s16 = scalar_lea.sflag [#allocation4], 1
    %17 = vsyncpa %s16, 0
    %18 = vsyncpa [#allocation6], 0
    %s19 = scalar_lea.sflag [#allocation6], 1
    %20 = vsyncpa %s19, 0
    loop: start=0, step=1, limit=6
    $region2: #{tpu_custom_call.1} parent=1 // loop_pre_header
      _
    $region3: #{tpu_custom_call.1} parent=1 // loop_header
      %s22 = sphi 0, %s26
      %p23 = scmp.ge.s32.totalorder %s22, 6
      %s29 = sphi 0, %s41
      %s30 = sphi 0, %s37
      %s31 = sphi 0, %s29
      %s32 = sphi 0, %s30
      %s33 = sphi 0, %s31
      %s34 = sphi 0, %s32
      %s44 = sphi 0, %s46
      %s47 = sphi 0, %s44
      %s48 = sphi 0, %s47
      %s64 = sphi 0, %s48
      %s70 = sphi 0, %s72
      %s73 = sphi 0, %s70
      %s74 = sphi 0, %s73
      %s90 = sphi 0, %s74
      %s96 = sphi 0, %s98
      %s99 = sphi 0, %s96
      %s100 = sphi 0, %s99
      %s116 = sphi 0, %s100
      %s122 = sphi 0, %s124
      %s125 = sphi 0, %s122
      %s126 = sphi 0, %s125
      %s142 = sphi 0, %s126
      %s148 = sphi 0, %s150
      %s151 = sphi 0, %s148
      %s152 = sphi 0, %s151
      %s168 = sphi 0, %s152
      %s174 = sphi 0, %s176
      %s177 = sphi 0, %s174
      %s178 = sphi 0, %s177
      %s194 = sphi 0, %s178
      %s200 = sphi 0, %s202
      %s203 = sphi 0, %s200
      %s204 = sphi 0, %s203
      %s220 = sphi 0, %s204
      %s224 = sphi 0, %s224
      %s226 = sphi 0, %s224
      %s227 = sphi 0, %s226
      %s241 = sphi 0, %s227
      %s247 = sphi 0, %s249
      %s250 = sphi 0, %s247
      %s251 = sphi 0, %s250
      %s267 = sphi 0, %s251
      %s275 = sphi 0, %s277
      %s278 = sphi 0, %s275
      %s279 = sphi 0, %s278
      %s295 = sphi 0, %s279
    $region4: #{tpu_custom_call.1} parent=1 // loop_header_branch
      %25 = sbr.rel (%p23) target = $region8
    $region5: #{tpu_custom_call.1} parent=1 // loop_body
      %s27 = ssub.s32 %s22, 1
      %s28 = ssub.s32 %s22, 2
      %s35 = sadd.s32 1, %s30
      %p36 = scmp.ge.s32.totalorder %s35, 2
      %s37 = scalar_select %p36, 0, %s35
      %s38 = sadd.s32 1, %s29
      %s39 = scalar_select %p36, %s38, %s29
      %p40 = scmp.ge.s32.totalorder %s39, 2
      %s41 = scalar_select %p40, 0, %s39
      %s42 = ssub.s32 %s29, %s41
      %p43 = scmp.eq.s32.totalorder %s42, 0
      %s45 = sadd.s32 %s44, 1
      %s46 = scalar_select %p43, %s44, %s45
      %p49 = pneg %p43
      %p50 = scmp.eq.s32.totalorder %s22, 3
      %p51 = por %p49, %p50
      %p52 = scmp.ne.s32.totalorder %s44, %s47
      %p53 = scmp.eq.s32.totalorder %s22, 0
      %p54 = por %p52, %p53
      %p55 = scmp.ne.s32.totalorder %s44, %s47
      %p56 = scmp.eq.s32.totalorder %s27, 3
      %p57 = por %p55, %p56
      %p58 = scmp.ne.s32.totalorder %s47, %s48
      %p59 = scmp.eq.s32.totalorder %s27, 0
      %p60 = por %p58, %p59
      %p61 = scmp.ne.s32.totalorder %s47, %s48
      %p62 = scmp.eq.s32.totalorder %s28, 3
      %p63 = por %p61, %p62
      %p65 = scmp.ne.s32.totalorder %s48, %s64
      %p66 = scmp.eq.s32.totalorder %s28, 0
      %p67 = por %p65, %p66
      %s68 = ssub.s32 %s29, %s41
      %p69 = scmp.eq.s32.totalorder %s68, 0
      %s71 = sadd.s32 %s70, 1
      %s72 = scalar_select %p69, %s70, %s71
      %p75 = pneg %p69
      %p76 = scmp.eq.s32.totalorder %s22, 3
      %p77 = por %p75, %p76
      %p78 = scmp.ne.s32.totalorder %s70, %s73
      %p79 = scmp.eq.s32.totalorder %s22, 0
      %p80 = por %p78, %p79
      %p81 = scmp.ne.s32.totalorder %s70, %s73
      %p82 = scmp.eq.s32.totalorder %s27, 3
      %p83 = por %p81, %p82
      %p84 = scmp.ne.s32.totalorder %s73, %s74
      %p85 = scmp.eq.s32.totalorder %s27, 0
      %p86 = por %p84, %p85
      %p87 = scmp.ne.s32.totalorder %s73, %s74
      %p88 = scmp.eq.s32.totalorder %s28, 3
      %p89 = por %p87, %p88
      %p91 = scmp.ne.s32.totalorder %s74, %s90
      %p92 = scmp.eq.s32.totalorder %s28, 0
      %p93 = por %p91, %p92
      %s94 = ssub.s32 %s29, %s41
      %p95 = scmp.eq.s32.totalorder %s94, 0
      %s97 = sadd.s32 %s96, 1
      %s98 = scalar_select %p95, %s96, %s97
      %p101 = pneg %p95
      %p102 = scmp.eq.s32.totalorder %s22, 3
      %p103 = por %p101, %p102
      %p104 = scmp.ne.s32.totalorder %s96, %s99
      %p105 = scmp.eq.s32.totalorder %s22, 0
      %p106 = por %p104, %p105
      %p107 = scmp.ne.s32.totalorder %s96, %s99
      %p108 = scmp.eq.s32.totalorder %s27, 3
      %p109 = por %p107, %p108
      %p110 = scmp.ne.s32.totalorder %s99, %s100
      %p111 = scmp.eq.s32.totalorder %s27, 0
      %p112 = por %p110, %p111
      %p113 = scmp.ne.s32.totalorder %s99, %s100
      %p114 = scmp.eq.s32.totalorder %s28, 3
      %p115 = por %p113, %p114
      %p117 = scmp.ne.s32.totalorder %s100, %s116
      %p118 = scmp.eq.s32.totalorder %s28, 0
      %p119 = por %p117, %p118
      %s120 = ssub.s32 %s30, %s37
      %p121 = scmp.eq.s32.totalorder %s120, 0
      %s123 = sadd.s32 %s122, 1
      %s124 = scalar_select %p121, %s122, %s123
      %p127 = pneg %p121
      %p128 = scmp.eq.s32.totalorder %s22, 3
      %p129 = por %p127, %p128
      %p130 = scmp.ne.s32.totalorder %s122, %s125
      %p131 = scmp.eq.s32.totalorder %s22, 0
      %p132 = por %p130, %p131
      %p133 = scmp.ne.s32.totalorder %s122, %s125
      %p134 = scmp.eq.s32.totalorder %s27, 3
      %p135 = por %p133, %p134
      %p136 = scmp.ne.s32.totalorder %s125, %s126
      %p137 = scmp.eq.s32.totalorder %s27, 0
      %p138 = por %p136, %p137
      %p139 = scmp.ne.s32.totalorder %s125, %s126
      %p140 = scmp.eq.s32.totalorder %s28, 3
      %p141 = por %p139, %p140
      %p143 = scmp.ne.s32.totalorder %s126, %s142
      %p144 = scmp.eq.s32.totalorder %s28, 0
      %p145 = por %p143, %p144
      %s146 = ssub.s32 %s30, %s37
      %p147 = scmp.eq.s32.totalorder %s146, 0
      %s149 = sadd.s32 %s148, 1
      %s150 = scalar_select %p147, %s148, %s149
      %p153 = pneg %p147
      %p154 = scmp.eq.s32.totalorder %s22, 3
      %p155 = por %p153, %p154
      %p156 = scmp.ne.s32.totalorder %s148, %s151
      %p157 = scmp.eq.s32.totalorder %s22, 0
      %p158 = por %p156, %p157
      %p159 = scmp.ne.s32.totalorder %s148, %s151
      %p160 = scmp.eq.s32.totalorder %s27, 3
      %p161 = por %p159, %p160
      %p162 = scmp.ne.s32.totalorder %s151, %s152
      %p163 = scmp.eq.s32.totalorder %s27, 0
      %p164 = por %p162, %p163
      %p165 = scmp.ne.s32.totalorder %s151, %s152
      %p166 = scmp.eq.s32.totalorder %s28, 3
      %p167 = por %p165, %p166
      %p169 = scmp.ne.s32.totalorder %s152, %s168
      %p170 = scmp.eq.s32.totalorder %s28, 0
      %p171 = por %p169, %p170
      %s172 = ssub.s32 %s30, %s37
      %p173 = scmp.eq.s32.totalorder %s172, 0
      %s175 = sadd.s32 %s174, 1
      %s176 = scalar_select %p173, %s174, %s175
      %p179 = pneg %p173
      %p180 = scmp.eq.s32.totalorder %s22, 3
      %p181 = por %p179, %p180
      %p182 = scmp.ne.s32.totalorder %s174, %s177
      %p183 = scmp.eq.s32.totalorder %s22, 0
      %p184 = por %p182, %p183
      %p185 = scmp.ne.s32.totalorder %s174, %s177
      %p186 = scmp.eq.s32.totalorder %s27, 3
      %p187 = por %p185, %p186
      %p188 = scmp.ne.s32.totalorder %s177, %s178
      %p189 = scmp.eq.s32.totalorder %s27, 0
      %p190 = por %p188, %p189
      %p191 = scmp.ne.s32.totalorder %s177, %s178
      %p192 = scmp.eq.s32.totalorder %s28, 3
      %p193 = por %p191, %p192
      %p195 = scmp.ne.s32.totalorder %s178, %s194
      %p196 = scmp.eq.s32.totalorder %s28, 0
      %p197 = por %p195, %p196
      %s198 = ssub.s32 %s30, %s37
      %p199 = scmp.eq.s32.totalorder %s198, 0
      %s201 = sadd.s32 %s200, 1
      %s202 = scalar_select %p199, %s200, %s201
      %p205 = pneg %p199
      %p206 = scmp.eq.s32.totalorder %s22, 3
      %p207 = por %p205, %p206
      %p208 = scmp.ne.s32.totalorder %s200, %s203
      %p209 = scmp.eq.s32.totalorder %s22, 0
      %p210 = por %p208, %p209
      %p211 = scmp.ne.s32.totalorder %s200, %s203
      %p212 = scmp.eq.s32.totalorder %s27, 3
      %p213 = por %p211, %p212
      %p214 = scmp.ne.s32.totalorder %s203, %s204
      %p215 = scmp.eq.s32.totalorder %s27, 0
      %p216 = por %p214, %p215
      %p217 = scmp.ne.s32.totalorder %s203, %s204
      %p218 = scmp.eq.s32.totalorder %s28, 3
      %p219 = por %p217, %p218
      %p221 = scmp.ne.s32.totalorder %s204, %s220
      %p222 = scmp.eq.s32.totalorder %s28, 0
      %p223 = por %p221, %p222
      %s225 = sadd.s32 %s224, 1
      %p228 = scmp.eq.s32.totalorder %s22, 3
      %p229 = scmp.ne.s32.totalorder %s224, %s226
      %p230 = scmp.eq.s32.totalorder %s22, 0
      %p231 = por %p229, %p230
      %p232 = scmp.ne.s32.totalorder %s224, %s226
      %p233 = scmp.eq.s32.totalorder %s27, 3
      %p234 = por %p232, %p233
      %p235 = scmp.ne.s32.totalorder %s226, %s227
      %p236 = scmp.eq.s32.totalorder %s27, 0
      %p237 = por %p235, %p236
      %p238 = scmp.ne.s32.totalorder %s226, %s227
      %p239 = scmp.eq.s32.totalorder %s28, 3
      %p240 = por %p238, %p239
      %p242 = scmp.ne.s32.totalorder %s227, %s241
      %p243 = scmp.eq.s32.totalorder %s28, 0
      %p244 = por %p242, %p243
      %s245 = ssub.s32 %s29, %s41
      %p246 = scmp.eq.s32.totalorder %s245, 0
      %s248 = sadd.s32 %s247, 1
      %s249 = scalar_select %p246, %s247, %s248
      %p252 = pneg %p246
      %p253 = scmp.eq.s32.totalorder %s22, 3
      %p254 = por %p252, %p253
      %p255 = scmp.ne.s32.totalorder %s247, %s250
      %p256 = scmp.eq.s32.totalorder %s22, 0
      %p257 = por %p255, %p256
      %p258 = scmp.ne.s32.totalorder %s247, %s250
      %p259 = scmp.eq.s32.totalorder %s27, 3
      %p260 = por %p258, %p259
      %p261 = scmp.ne.s32.totalorder %s250, %s251
      %p262 = scmp.eq.s32.totalorder %s27, 0
      %p263 = por %p261, %p262
      %p264 = scmp.ne.s32.totalorder %s250, %s251
      %p265 = scmp.eq.s32.totalorder %s28, 3
      %p266 = por %p264, %p265
      %p268 = scmp.ne.s32.totalorder %s251, %s267
      %p269 = scmp.eq.s32.totalorder %s28, 0
      %p270 = por %p268, %p269
      %s271 = ssub.s32 %s29, %s41
      %s272 = ssub.s32 %s30, %s37
      %s273 = sor.u32 %s271, %s272
      %p274 = scmp.eq.s32.totalorder %s273, 0
      %s276 = sadd.s32 %s275, 1
      %s277 = scalar_select %p274, %s275, %s276
      %p280 = pneg %p274
      %p281 = scmp.eq.s32.totalorder %s22, 3
      %p282 = por %p280, %p281
      %p283 = scmp.ne.s32.totalorder %s275, %s278
      %p284 = scmp.eq.s32.totalorder %s22, 0
      %p285 = por %p283, %p284
      %p286 = scmp.ne.s32.totalorder %s275, %s278
      %p287 = scmp.eq.s32.totalorder %s27, 3
      %p288 = por %p286, %p287
      %p289 = scmp.ne.s32.totalorder %s278, %s279
      %p290 = scmp.eq.s32.totalorder %s27, 0
      %p291 = por %p289, %p290
      %p292 = scmp.ne.s32.totalorder %s278, %s279
      %p293 = scmp.eq.s32.totalorder %s28, 3
      %p294 = por %p292, %p293
      %p296 = scmp.ne.s32.totalorder %s279, %s295
      %p297 = scmp.eq.s32.totalorder %s28, 0
      %p298 = por %p296, %p297
      %p299 = scmp.le.s32.totalorder 1, %s22
      %p300 = scmp.lt.s32.totalorder %s22, 5
      %p301 = pnand %p299, %p300
      %p302 = pneg %p301
      // Predicated region
      $region9: #{tpu_custom_call.1} parent=5 // pred_check
        _
      $region10: #{tpu_custom_call.1} parent=5 // pred_check_branch
        %304 = sbr.rel (%p301) target = $region12
      $region11: #{tpu_custom_call.1} parent=5 // pred_region
        %s305 = ssub.s32 %s22, 1
        // Predicated region
        $region13: #{tpu_custom_call.1} parent=11 // pred_check
          %p306 = pneg %p237
        $region14: #{tpu_custom_call.1} parent=11 // pred_check_branch
          %308 = sbr.rel (%p306) target = $region16
        $region15: #{tpu_custom_call.1} parent=11 // pred_region
          _
        $region16: #{tpu_custom_call.1} parent=11 // pred_fallthru
          _
      $region12: #{tpu_custom_call.1} parent=5 // pred_fallthru
        _
      %p309 = scmp.lt.s32.totalorder %s22, 4
      // Predicated region
      $region17: #{tpu_custom_call.1} parent=5 // pred_check
        %p310 = pneg %p309
      $region18: #{tpu_custom_call.1} parent=5 // pred_check_branch
        %312 = sbr.rel (%p310) target = $region20
      $region19: #{tpu_custom_call.1} parent=5 // pred_region
        // Predicated region
        $region21: #{tpu_custom_call.1} parent=19 // pred_check
          %p313 = pneg %p54
        $region22: #{tpu_custom_call.1} parent=19 // pred_check_branch
          %315 = sbr.rel (%p313) target = $region24
        $region23: #{tpu_custom_call.1} parent=19 // pred_region
          %p316 = scmp.lt.s32.totalorder %s29, 1
          %s317 = scalar_select %p316, %s29, 1
          %s318 = smul.addr %s317, 8
          %s319 = scalar_lea.vmem %s0, %s318
        $region24: #{tpu_custom_call.1} parent=19 // pred_fallthru
          _
        // Predicated region
        $region25: #{tpu_custom_call.1} parent=19 // pred_check
          %p320 = pneg %p80
        $region26: #{tpu_custom_call.1} parent=19 // pred_check_branch
          %322 = sbr.rel (%p320) target = $region28
        $region27: #{tpu_custom_call.1} parent=19 // pred_region
          %p323 = scmp.lt.s32.totalorder %s29, 1
          %s324 = scalar_select %p323, %s29, 1
          %s325 = smul.addr %s324, 8
          %s326 = scalar_lea.vmem %s1, %s325
        $region28: #{tpu_custom_call.1} parent=19 // pred_fallthru
          _
        // Predicated region
        $region29: #{tpu_custom_call.1} parent=19 // pred_check
          %p327 = pneg %p106
        $region30: #{tpu_custom_call.1} parent=19 // pred_check_branch
          %329 = sbr.rel (%p327) target = $region32
        $region31: #{tpu_custom_call.1} parent=19 // pred_region
          %p330 = scmp.lt.s32.totalorder %s29, 1
          %s331 = scalar_select %p330, %s29, 1
          %s332 = smul.addr %s331, 8
          %s333 = scalar_lea.vmem %s2, %s332
        $region32: #{tpu_custom_call.1} parent=19 // pred_fallthru
          _
        // Predicated region
        $region33: #{tpu_custom_call.1} parent=19 // pred_check
          %p334 = pneg %p132
        $region34: #{tpu_custom_call.1} parent=19 // pred_check_branch
          %336 = sbr.rel (%p334) target = $region36
        $region35: #{tpu_custom_call.1} parent=19 // pred_region
          %p337 = scmp.lt.s32.totalorder %s30, 1
          %s338 = scalar_select %p337, %s30, 1
          %s339 = smul.addr %s338, 4
          %s340 = smul.addr %s339, 4
          %s341 = scalar_lea.vmem %s3, %s340
        $region36: #{tpu_custom_call.1} parent=19 // pred_fallthru
          _
        // Predicated region
        $region37: #{tpu_custom_call.1} parent=19 // pred_check
          %p342 = pneg %p158
        $region38: #{tpu_custom_call.1} parent=19 // pred_check_branch
          %344 = sbr.rel (%p342) target = $region40
        $region39: #{tpu_custom_call.1} parent=19 // pred_region
          %p345 = scmp.lt.s32.totalorder %s30, 1
          %s346 = scalar_select %p345, %s30, 1
          %s347 = smul.addr %s346, 4
          %s348 = smul.addr %s347, 4
          %s349 = scalar_lea.vmem %s4, %s348
        $region40: #{tpu_custom_call.1} parent=19 // pred_fallthru
          _
        // Predicated region
        $region41: #{tpu_custom_call.1} parent=19 // pred_check
          %p350 = pneg %p184
        $region42: #{tpu_custom_call.1} parent=19 // pred_check_branch
          %352 = sbr.rel (%p350) target = $region44
        $region43: #{tpu_custom_call.1} parent=19 // pred_region
          %p353 = scmp.lt.s32.totalorder %s30, 1
          %s354 = scalar_select %p353, %s30, 1
          %s355 = smul.addr %s354, 4
          %s356 = smul.addr %s355, 4
          %s357 = scalar_lea.vmem %s5, %s356
        $region44: #{tpu_custom_call.1} parent=19 // pred_fallthru
          _
        // Predicated region
        $region45: #{tpu_custom_call.1} parent=19 // pred_check
          %p358 = pneg %p210
        $region46: #{tpu_custom_call.1} parent=19 // pred_check_branch
          %360 = sbr.rel (%p358) target = $region48
        $region47: #{tpu_custom_call.1} parent=19 // pred_region
          %p361 = scmp.lt.s32.totalorder %s30, 1
          %s362 = scalar_select %p361, %s30, 1
          %s363 = smul.addr %s362, 2
          %s364 = smul.addr %s363, 4
          %s365 = scalar_lea.vmem %s6, %s364
        $region48: #{tpu_custom_call.1} parent=19 // pred_fallthru
          _
      $region20: #{tpu_custom_call.1} parent=5 // pred_fallthru
        _
      %p366 = scmp.le.s32.totalorder 1, %s22
      %p367 = scmp.lt.s32.totalorder %s22, 5
      %p368 = pnand %p366, %p367
      %p369 = pneg %p368
      // Predicated region
      $region49: #{tpu_custom_call.1} parent=5 // pred_check
        _
      $region50: #{tpu_custom_call.1} parent=5 // pred_check_branch
        %371 = sbr.rel (%p368) target = $region52
      $region51: #{tpu_custom_call.1} parent=5 // pred_region
        %s372 = ssub.s32 %s22, 1
        %p373 = scmp.lt.s32.totalorder %s31, 1
        %s374 = scalar_select %p373, %s31, 1
        %s375 = smul.addr %s374, 8
        %s376 = scalar_lea.vmem %s0, %s375
        %p377 = pneg %p60
        %p378 = pneg %p57
        %p379 = scmp.lt.s32.totalorder %s31, 1
        %s380 = scalar_select %p379, %s31, 1
        %s381 = smul.addr %s380, 8
        %s382 = scalar_lea.vmem %s1, %s381
        %p383 = pneg %p86
        %p384 = pneg %p83
        %p385 = scmp.lt.s32.totalorder %s31, 1
        %s386 = scalar_select %p385, %s31, 1
        %s387 = smul.addr %s386, 8
        %s388 = scalar_lea.vmem %s2, %s387
        %p389 = pneg %p112
        %p390 = pneg %p109
        %p391 = scmp.lt.s32.totalorder %s32, 1
        %s392 = scalar_select %p391, %s32, 1
        %s393 = smul.addr %s392, 4
        %s394 = smul.addr %s393, 4
        %s395 = scalar_lea.vmem %s3, %s394
        %p396 = pneg %p138
        %p397 = pneg %p135
        %p398 = scmp.lt.s32.totalorder %s32, 1
        %s399 = scalar_select %p398, %s32, 1
        %s400 = smul.addr %s399, 4
        %s401 = smul.addr %s400, 4
        %s402 = scalar_lea.vmem %s4, %s401
        %p403 = pneg %p164
        %p404 = pneg %p161
        %p405 = scmp.lt.s32.totalorder %s32, 1
        %s406 = scalar_select %p405, %s32, 1
        %s407 = smul.addr %s406, 4
        %s408 = smul.addr %s407, 4
        %s409 = scalar_lea.vmem %s5, %s408
        %p410 = pneg %p190
        %p411 = pneg %p187
        %p412 = scmp.lt.s32.totalorder %s32, 1
        %s413 = scalar_select %p412, %s32, 1
        %s414 = smul.addr %s413, 2
        %s415 = smul.addr %s414, 4
        %s416 = scalar_lea.vmem %s6, %s415
        %p417 = pneg %p216
        %p418 = pneg %p213
        %p419 = pneg %p237
        %p420 = pneg %p234
        %p421 = pneg %p263
        %p422 = pneg %p260
        %s423 = sand.u32 %s250, 1
        %s424 = scalar_lea.sflag [#allocation4], %s423
        %s425 = sand.u32 %s250, 1
        %s426 = smul.addr %s425, 8
        %s427 = scalar_lea.vmem [#allocation3], %s426
        %p428 = pneg %p291
        %p429 = pneg %p288
        %s430 = sand.u32 %s278, 1
        %s431 = scalar_lea.sflag [#allocation6], %s430
        %s432 = sand.u32 %s278, 1
        %s433 = smul.addr %s432, 8
        %s434 = scalar_lea.vmem [#allocation5], %s433
        %p435 = scmp.lt.s32.totalorder %s31, 1
        %s436 = scalar_select %p435, %s31, 1
        %s437 = smul.addr %s436, 8
        %s438 = scalar_lea.vmem %s0, %s437
        %p439 = scmp.lt.s32.totalorder %s31, 1
        %s440 = scalar_select %p439, %s31, 1
        %s441 = smul.addr %s440, 8
        %s442 = scalar_lea.vmem %s1, %s441
        %p443 = scmp.lt.s32.totalorder %s31, 1
        %s444 = scalar_select %p443, %s31, 1
        %s445 = smul.addr %s444, 8
        %s446 = scalar_lea.vmem %s2, %s445
        %p447 = scmp.lt.s32.totalorder %s32, 1
        %s448 = scalar_select %p447, %s32, 1
        %s449 = smul.addr %s448, 4
        %s450 = smul.addr %s449, 4
        %s451 = scalar_lea.vmem %s3, %s450
        %p452 = scmp.lt.s32.totalorder %s32, 1
        %s453 = scalar_select %p452, %s32, 1
        %s454 = smul.addr %s453, 4
        %s455 = smul.addr %s454, 4
        %s456 = scalar_lea.vmem %s4, %s455
        %p457 = scmp.lt.s32.totalorder %s32, 1
        %s458 = scalar_select %p457, %s32, 1
        %s459 = smul.addr %s458, 4
        %s460 = smul.addr %s459, 4
        %s461 = scalar_lea.vmem %s5, %s460
        %p462 = scmp.lt.s32.totalorder %s32, 1
        %s463 = scalar_select %p462, %s32, 1
        %s464 = smul.addr %s463, 2
        %s465 = smul.addr %s464, 4
        %s466 = scalar_lea.vmem %s6, %s465
        %v468 = vld [vmem:[%s438] sm:$0xff]
        %v469 = vpack.c.bf16 %v468, %v468
        %v470 = vld [vmem:[%s442] sm:$0xff]
        %v471 = vpack.c.bf16 %v470, %v470
        %v472 = vld [vmem:[%s446] sm:$0xff]
        %v473 = vpack.c.bf16 %v472, %v472
        %v474 = vld [vmem:[%s451] sm:$0xf]
        %v475 = vld [vmem:[%s451 + $0x4] sm:$0xf]
        %v476 = vld [vmem:[%s451 + $0x8] sm:$0xf]
        %v477 = vld [vmem:[%s451 + $0xc] sm:$0xf]
        %v482 = vunpack.c.l.b16 %v474
        %v483 = vunpack.c.l.b16 %v475
        %v484 = vunpack.c.l.b16 %v476
        %v485 = vunpack.c.l.b16 %v477
        %v486 = vpack.c.b16 %v483, %v482
        %v487 = vpack.c.b16 %v485, %v484
        %vm490 = vcmask 261120
        %v492 = vsel %vm490, %v469, 0
        %494 = vmatprep.subr.bf16.mxu0 0
        %495 = vmatpush1.bf16.msra.mxu0 %v486
        %496 = vmatprep.subr.bf16.mxu0 0
        %497 = vmatpush1.bf16.msra.mxu0 %v487
        %498 = vmatprep.subr.bf16.mxu0 0
        %499 = vmatpush1.bf16.msra.mxu0 0
        %500 = vmatprep.subr.bf16.mxu0 0
        %501 = vmatpush1.bf16.msra.mxu0 0
        %502 = vmatprep.subr.bf16.mxu0 0
        %503 = vmatpush1.bf16.msra.mxu0 0
        %504 = vmatprep.subr.bf16.mxu0 0
        %505 = vmatpush1.bf16.msra.mxu0 0
        %506 = vmatprep.subr.bf16.mxu0 0
        %507 = vmatpush1.bf16.msra.mxu0 0
        %508 = vmatprep.subr.bf16.mxu0 0
        %509 = vmatpush1.bf16.msra.mxu0 0
        %510 = vmatprep.subr.bf16.mxu0 0
        %511 = vmatpush1.bf16.msra.mxu0 0
        %512 = vmatprep.subr.bf16.mxu0 0
        %513 = vmatpush1.bf16.msra.mxu0 0
        %514 = vmatprep.subr.bf16.mxu0 0
        %515 = vmatpush1.bf16.msra.mxu0 0
        %516 = vmatprep.subr.bf16.mxu0 0
        %517 = vmatpush1.bf16.msra.mxu0 0
        %518 = vmatprep.subr.bf16.mxu0 0
        %519 = vmatpush1.bf16.msra.mxu0 0
        %520 = vmatprep.subr.bf16.mxu0 0
        %521 = vmatpush1.bf16.msra.mxu0 0
        %522 = vmatprep.subr.bf16.mxu0 0
        %523 = vmatpush1.bf16.msra.mxu0 0
        %524 = vmatprep.subr.bf16.mxu0 0
        %525 = vmatpush1.bf16.msra.mxu0 0
        %526 = vmatprep.mubr.bf16.mxu0 0
        %527 = vmatmul.mubr.bf16.gmra.mrb[0].mxu0 %v492
        %v528 = vpop.f32.mrb[0].mxu0
        %v529 = vadd.f32 0.0, %v528
        %v530 = vpop.f32.mrb[0].mxu0
        %v531 = vpop.f32.mrb[0].mxu0
        %v532 = vpop.f32.mrb[0].mxu0
        %533 = vdwg.mxu0
        %v534 = vld [vmem:[%s456] sm:$0xf]
        %v535 = vld [vmem:[%s456 + $0x4] sm:$0xf]
        %v536 = vld [vmem:[%s456 + $0x8] sm:$0xf]
        %v537 = vld [vmem:[%s456 + $0xc] sm:$0xf]
        %v542 = vunpack.c.l.b16 %v534
        %v543 = vunpack.c.l.b16 %v535
        %v544 = vunpack.c.l.b16 %v536
        %v545 = vunpack.c.l.b16 %v537
        %v546 = vpack.c.b16 %v543, %v542
        %v547 = vpack.c.b16 %v545, %v544
        %v551 = vsel %vm490, %v471, 0
        %553 = vmatprep.subr.bf16.mxu0 0
        %554 = vmatpush1.bf16.msra.mxu0 %v546
        %555 = vmatprep.subr.bf16.mxu0 0
        %556 = vmatpush1.bf16.msra.mxu0 %v547
        %557 = vmatprep.subr.bf16.mxu0 0
        %558 = vmatpush1.bf16.msra.mxu0 0
        %559 = vmatprep.subr.bf16.mxu0 0
        %560 = vmatpush1.bf16.msra.mxu0 0
        %561 = vmatprep.subr.bf16.mxu0 0
        %562 = vmatpush1.bf16.msra.mxu0 0
        %563 = vmatprep.subr.bf16.mxu0 0
        %564 = vmatpush1.bf16.msra.mxu0 0
        %565 = vmatprep.subr.bf16.mxu0 0
        %566 = vmatpush1.bf16.msra.mxu0 0
        %567 = vmatprep.subr.bf16.mxu0 0
        %568 = vmatpush1.bf16.msra.mxu0 0
        %569 = vmatprep.subr.bf16.mxu0 0
        %570 = vmatpush1.bf16.msra.mxu0 0
        %571 = vmatprep.subr.bf16.mxu0 0
        %572 = vmatpush1.bf16.msra.mxu0 0
        %573 = vmatprep.subr.bf16.mxu0 0
        %574 = vmatpush1.bf16.msra.mxu0 0
        %575 = vmatprep.subr.bf16.mxu0 0
        %576 = vmatpush1.bf16.msra.mxu0 0
        %577 = vmatprep.subr.bf16.mxu0 0
        %578 = vmatpush1.bf16.msra.mxu0 0
        %579 = vmatprep.subr.bf16.mxu0 0
        %580 = vmatpush1.bf16.msra.mxu0 0
        %581 = vmatprep.subr.bf16.mxu0 0
        %582 = vmatpush1.bf16.msra.mxu0 0
        %583 = vmatprep.subr.bf16.mxu0 0
        %584 = vmatpush1.bf16.msra.mxu0 0
        %585 = vmatprep.mubr.bf16.mxu0 0
        %586 = vmatmul.mubr.bf16.gmra.mrb[0].mxu0 %v551
        %v587 = vpop.f32.mrb[0].mxu0
        %v588 = vadd.f32 0.0, %v587
        %v589 = vpop.f32.mrb[0].mxu0
        %v590 = vpop.f32.mrb[0].mxu0
        %v591 = vpop.f32.mrb[0].mxu0
        %592 = vdwg.mxu0
        %v593 = vld [vmem:[%s461] sm:$0xf]
        %v594 = vld [vmem:[%s461 + $0x4] sm:$0xf]
        %v595 = vld [vmem:[%s461 + $0x8] sm:$0xf]
        %v596 = vld [vmem:[%s461 + $0xc] sm:$0xf]
        %v601 = vunpack.c.l.b16 %v593
        %v602 = vunpack.c.l.b16 %v594
        %v603 = vunpack.c.l.b16 %v595
        %v604 = vunpack.c.l.b16 %v596
        %v605 = vpack.c.b16 %v602, %v601
        %v606 = vpack.c.b16 %v604, %v603
        %v610 = vsel %vm490, %v473, 0
        %612 = vmatprep.subr.bf16.mxu0 0
        %613 = vmatpush1.bf16.msra.mxu0 %v605
        %614 = vmatprep.subr.bf16.mxu0 0
        %615 = vmatpush1.bf16.msra.mxu0 %v606
        %616 = vmatprep.subr.bf16.mxu0 0
        %617 = vmatpush1.bf16.msra.mxu0 0
        %618 = vmatprep.subr.bf16.mxu0 0
        %619 = vmatpush1.bf16.msra.mxu0 0
        %620 = vmatprep.subr.bf16.mxu0 0
        %621 = vmatpush1.bf16.msra.mxu0 0
        %622 = vmatprep.subr.bf16.mxu0 0
        %623 = vmatpush1.bf16.msra.mxu0 0
        %624 = vmatprep.subr.bf16.mxu0 0
        %625 = vmatpush1.bf16.msra.mxu0 0
        %626 = vmatprep.subr.bf16.mxu0 0
        %627 = vmatpush1.bf16.msra.mxu0 0
        %628 = vmatprep.subr.bf16.mxu0 0
        %629 = vmatpush1.bf16.msra.mxu0 0
        %630 = vmatprep.subr.bf16.mxu0 0
        %631 = vmatpush1.bf16.msra.mxu0 0
        %632 = vmatprep.subr.bf16.mxu0 0
        %633 = vmatpush1.bf16.msra.mxu0 0
        %634 = vmatprep.subr.bf16.mxu0 0
        %635 = vmatpush1.bf16.msra.mxu0 0
        %636 = vmatprep.subr.bf16.mxu0 0
        %637 = vmatpush1.bf16.msra.mxu0 0
        %638 = vmatprep.subr.bf16.mxu0 0
        %639 = vmatpush1.bf16.msra.mxu0 0
        %640 = vmatprep.subr.bf16.mxu0 0
        %641 = vmatpush1.bf16.msra.mxu0 0
        %642 = vmatprep.subr.bf16.mxu0 0
        %643 = vmatpush1.bf16.msra.mxu0 0
        %644 = vmatprep.mubr.bf16.mxu0 0
        %645 = vmatmul.mubr.bf16.gmra.mrb[0].mxu0 %v610
        %v646 = vpop.f32.mrb[0].mxu0
        %v647 = vadd.f32 0.0, %v646
        %v648 = vpop.f32.mrb[0].mxu0
        %v649 = vpop.f32.mrb[0].mxu0
        %v650 = vpop.f32.mrb[0].mxu0
        %651 = vdwg.mxu0
        %v652 = vpack.c.bf16 %v529, %v529
        %v653 = vpack.c.bf16 %v588, %v588
        %vm654 = vcmask 130048
        %v656 = vsel %vm654, %v652, 0
        %v659 = vsel %vm654, %v653, 0
        %661 = vmatprep.subr.bf16.mxu0 0
        %662 = vmatpush1.bf16.xpose.msra.mxu0 %v659
        %663 = vmatprep.subr.bf16.mxu0 0
        %664 = vmatpush1.bf16.xpose.msra.mxu0 0
        %665 = vmatprep.subr.bf16.mxu0 0
        %666 = vmatpush1.bf16.xpose.msra.mxu0 0
        %667 = vmatprep.subr.bf16.mxu0 0
        %668 = vmatpush1.bf16.xpose.msra.mxu0 0
        %669 = vmatprep.subr.bf16.mxu0 0
        %670 = vmatpush1.bf16.xpose.msra.mxu0 0
        %671 = vmatprep.subr.bf16.mxu0 0
        %672 = vmatpush1.bf16.xpose.msra.mxu0 0
        %673 = vmatprep.subr.bf16.mxu0 0
        %674 = vmatpush1.bf16.xpose.msra.mxu0 0
        %675 = vmatprep.subr.bf16.mxu0 0
        %676 = vmatpush1.bf16.xpose.msra.mxu0 0
        %677 = vmatprep.subr.bf16.mxu0 0
        %678 = vmatpush1.bf16.xpose.msra.mxu0 0
        %679 = vmatprep.subr.bf16.mxu0 0
        %680 = vmatpush1.bf16.xpose.msra.mxu0 0
        %681 = vmatprep.subr.bf16.mxu0 0
        %682 = vmatpush1.bf16.xpose.msra.mxu0 0
        %683 = vmatprep.subr.bf16.mxu0 0
        %684 = vmatpush1.bf16.xpose.msra.mxu0 0
        %685 = vmatprep.subr.bf16.mxu0 0
        %686 = vmatpush1.bf16.xpose.msra.mxu0 0
        %687 = vmatprep.subr.bf16.mxu0 0
        %688 = vmatpush1.bf16.xpose.msra.mxu0 0
        %689 = vmatprep.subr.bf16.mxu0 0
        %690 = vmatpush1.bf16.xpose.msra.mxu0 0
        %691 = vmatprep.subr.bf16.mxu0 0
        %692 = vmatpush1.bf16.xpose.msra.mxu0 0
        %693 = vmatprep.mubr.bf16.mxu0 0
        %694 = vmatmul.mubr.bf16.gmra.mrb[0].mxu0 %v656
        %v695 = vpop.f32.mrb[0].mxu0
        %v696 = vadd.f32 0.0, %v695
        %v697 = vpop.f32.mrb[0].mxu0
        %v698 = vpop.f32.mrb[0].mxu0
        %v699 = vpop.f32.mrb[0].mxu0
        %700 = vdwg.mxu0
        %vm701 = vcmask 64512
        %v702 = vsel %vm701, %v696, -inf
        %703 = vmax.xlane.f32.xlu0 %v702
        %v704 = vpop.xlane.xlu0 %703
        %v705 = vsub.f32 %v696, %v704
        %v706 = vmul.f32 %v705, 1.442695
        %v707 = vpow.pop %v706
        %v708 = vsel %vm701, %v707, 0.0
        %709 = vadd.xlane.f32.xlu0 %v708
        %v710 = vpop.xlane.xlu0 %709
        %v711 = vrcp.pop %v710
        %v712 = vmul.f32 %v707, %v711
        %713 = vst.msk [vmem:[%s434] sm:$0xff] %vm701, %v712
        %v714 = vpack.c.bf16 %v712, %v712
        %v715 = vpack.c.bf16 %v647, %v647
        %v717 = vsel %vm701, %v714, 0
        %vm719 = vcmask 1043456
        %v721 = vsel %vm719, %v715, 0
        %723 = vmatprep.subr.bf16.mxu0 0
        %724 = vmatpush1.bf16.msra.mxu0 %v721
        %725 = vmatprep.subr.bf16.mxu0 0
        %726 = vmatpush1.bf16.msra.mxu0 0
        %727 = vmatprep.subr.bf16.mxu0 0
        %728 = vmatpush1.bf16.msra.mxu0 0
        %729 = vmatprep.subr.bf16.mxu0 0
        %730 = vmatpush1.bf16.msra.mxu0 0
        %731 = vmatprep.subr.bf16.mxu0 0
        %732 = vmatpush1.bf16.msra.mxu0 0
        %733 = vmatprep.subr.bf16.mxu0 0
        %734 = vmatpush1.bf16.msra.mxu0 0
        %735 = vmatprep.subr.bf16.mxu0 0
        %736 = vmatpush1.bf16.msra.mxu0 0
        %737 = vmatprep.subr.bf16.mxu0 0
        %738 = vmatpush1.bf16.msra.mxu0 0
        %739 = vmatprep.subr.bf16.mxu0 0
        %740 = vmatpush1.bf16.msra.mxu0 0
        %741 = vmatprep.subr.bf16.mxu0 0
        %742 = vmatpush1.bf16.msra.mxu0 0
        %743 = vmatprep.subr.bf16.mxu0 0
        %744 = vmatpush1.bf16.msra.mxu0 0
        %745 = vmatprep.subr.bf16.mxu0 0
        %746 = vmatpush1.bf16.msra.mxu0 0
        %747 = vmatprep.subr.bf16.mxu0 0
        %748 = vmatpush1.bf16.msra.mxu0 0
        %749 = vmatprep.subr.bf16.mxu0 0
        %750 = vmatpush1.bf16.msra.mxu0 0
        %751 = vmatprep.subr.bf16.mxu0 0
        %752 = vmatpush1.bf16.msra.mxu0 0
        %753 = vmatprep.subr.bf16.mxu0 0
        %754 = vmatpush1.bf16.msra.mxu0 0
        %755 = vmatprep.mubr.bf16.mxu0 0
        %756 = vmatmul.mubr.bf16.gmra.mrb[0].mxu0 %v717
        %v757 = vpop.f32.mrb[0].mxu0
        %v758 = vadd.f32 0.0, %v757
        %v759 = vpop.f32.mrb[0].mxu0
        %v760 = vpop.f32.mrb[0].mxu0
        %v761 = vpop.f32.mrb[0].mxu0
        %762 = vdwg.mxu0
        %v763 = vpack.c.bf16 %v758, %v758
        %v764 = vld [vmem:[%s466] sm:$0xf]
        %v765 = vld [vmem:[%s466 + $0x4] sm:$0xf]
        %v768 = vunpack.c.l.b16 %v764
        %v769 = vunpack.c.l.b16 %v765
        %v770 = vpack.c.b16 %v769, %v768
        %v773 = vsel %vm654, %v763, 0
        %775 = vmatprep.subr.bf16.mxu0 0
        %776 = vmatpush1.bf16.msra.mxu0 %v770
        %777 = vmatprep.subr.bf16.mxu0 0
        %778 = vmatpush1.bf16.msra.mxu0 0
        %779 = vmatprep.subr.bf16.mxu0 0
        %780 = vmatpush1.bf16.msra.mxu0 0
        %781 = vmatprep.subr.bf16.mxu0 0
        %782 = vmatpush1.bf16.msra.mxu0 0
        %783 = vmatprep.subr.bf16.mxu0 0
        %784 = vmatpush1.bf16.msra.mxu0 0
        %785 = vmatprep.subr.bf16.mxu0 0
        %786 = vmatpush1.bf16.msra.mxu0 0
        %787 = vmatprep.subr.bf16.mxu0 0
        %788 = vmatpush1.bf16.msra.mxu0 0
        %789 = vmatprep.subr.bf16.mxu0 0
        %790 = vmatpush1.bf16.msra.mxu0 0
        %791 = vmatprep.subr.bf16.mxu0 0
        %792 = vmatpush1.bf16.msra.mxu0 0
        %793 = vmatprep.subr.bf16.mxu0 0
        %794 = vmatpush1.bf16.msra.mxu0 0
        %795 = vmatprep.subr.bf16.mxu0 0
        %796 = vmatpush1.bf16.msra.mxu0 0
        %797 = vmatprep.subr.bf16.mxu0 0
        %798 = vmatpush1.bf16.msra.mxu0 0
        %799 = vmatprep.subr.bf16.mxu0 0
        %800 = vmatpush1.bf16.msra.mxu0 0
        %801 = vmatprep.subr.bf16.mxu0 0
        %802 = vmatpush1.bf16.msra.mxu0 0
        %803 = vmatprep.subr.bf16.mxu0 0
        %804 = vmatpush1.bf16.msra.mxu0 0
        %805 = vmatprep.subr.bf16.mxu0 0
        %806 = vmatpush1.bf16.msra.mxu0 0
        %807 = vmatprep.mubr.bf16.mxu0 0
        %808 = vmatmul.mubr.bf16.gmra.mrb[0].mxu0 %v773
        %v809 = vpop.f32.mrb[0].mxu0
        %v810 = vadd.f32 0.0, %v809
        %v811 = vpop.f32.mrb[0].mxu0
        %v812 = vpop.f32.mrb[0].mxu0
        %v813 = vpop.f32.mrb[0].mxu0
        %814 = vdwg.mxu0
        %p815 = scmp.eq.s32.totalorder %s32, 0
        // Predicated region
        $region53: #{tpu_custom_call.1} parent=51 // pred_check
          %p816 = pneg %p815
        $region54: #{tpu_custom_call.1} parent=51 // pred_check_branch
          %818 = sbr.rel (%p816) target = $region56
        $region55: #{tpu_custom_call.1} parent=51 // pred_region
          %v819 = vld [vmem:[%s7] sm:$0x1]
          %v821 = vlaneseq
          %v822 = vshrl.u32 %v821, 7
          %v823 = vsub.s32 0, %v822
          %v824 = vrot.slane %v819, %v823
          %826 = vst.msk [vmem:[#allocation2] sm:$0xff] %vm490, %v824
        $region56: #{tpu_custom_call.1} parent=51 // pred_fallthru
          _
        %v827 = vld [vmem:[#allocation2] sm:$0xff]
        %v828 = vadd.f32 %v827, %v810
        %829 = vst.msk [vmem:[#allocation2] sm:$0xff] %vm490, %v828
        %p830 = scmp.eq.s32.totalorder %s32, 1
        // Predicated region
        $region57: #{tpu_custom_call.1} parent=51 // pred_check
          %p831 = pneg %p830
        $region58: #{tpu_custom_call.1} parent=51 // pred_check_branch
          %833 = sbr.rel (%p831) target = $region60
        $region59: #{tpu_custom_call.1} parent=51 // pred_region
          %v834 = vld [vmem:[#allocation2] sm:$0xff]
          %835 = vst.msk [vmem:[%s427] sm:$0xff] %vm490, %v834
        $region60: #{tpu_custom_call.1} parent=51 // pred_fallthru
          _
        %s836 = sand.u32 %s250, 1
        %s837 = scalar_lea.sflag [#allocation4], %s836
        %s838 = sand.u32 %s250, 1
        %s839 = smul.addr %s838, 8
        %s840 = scalar_lea.vmem [#allocation3], %s839
        %s841 = sand.u32 %s278, 1
        %s842 = scalar_lea.sflag [#allocation6], %s841
        %s843 = sand.u32 %s278, 1
        %s844 = smul.addr %s843, 8
        %s845 = scalar_lea.vmem [#allocation5], %s844
        // Predicated region
        $region61: #{tpu_custom_call.1} parent=51 // pred_check
          %p846 = pneg %p260
        $region62: #{tpu_custom_call.1} parent=51 // pred_check_branch
          %848 = sbr.rel (%p846) target = $region64
        $region63: #{tpu_custom_call.1} parent=51 // pred_region
          %s850 = ssub.s32 128, 128
          %851 = vsyncadd %s837, %s850
          %s852 = smul.addr %s31, 128
          %s853 = scalar_lea.hbm %s8, %s852
          %s855 = sshll.u32 %s840, 4
          %s856 = int_to_ptr.vmem [resolvable:$true] %s855
          %858 = dma.vmem_to_hbm [thread:$0]  %s856, 128, %s853, %s837
        $region64: #{tpu_custom_call.1} parent=51 // pred_fallthru
          _
        // Predicated region
        $region65: #{tpu_custom_call.1} parent=51 // pred_check
          %p859 = pneg %p288
        $region66: #{tpu_custom_call.1} parent=51 // pred_check_branch
          %861 = sbr.rel (%p859) target = $region68
        $region67: #{tpu_custom_call.1} parent=51 // pred_region
          %s863 = ssub.s32 128, 128
          %864 = vsyncadd %s842, %s863
          %s865 = smul.addr %s31, 2
          %s866 = sadd.s32 %s32, %s865
          %s867 = smul.addr %s866, 128
          %s868 = scalar_lea.hbm %s9, %s867
          %s870 = sshll.u32 %s845, 4
          %s871 = int_to_ptr.vmem [resolvable:$true] %s870
          %873 = dma.vmem_to_hbm [thread:$0]  %s871, 128, %s868, %s842
        $region68: #{tpu_custom_call.1} parent=51 // pred_fallthru
          _
      $region52: #{tpu_custom_call.1} parent=5 // pred_fallthru
        _
      %p874 = scmp.le.s32.totalorder 2, %s22
      // Predicated region
      $region69: #{tpu_custom_call.1} parent=5 // pred_check
        %p875 = pneg %p874
      $region70: #{tpu_custom_call.1} parent=5 // pred_check_branch
        %877 = sbr.rel (%p875) target = $region72
      $region71: #{tpu_custom_call.1} parent=5 // pred_region
        %s878 = ssub.s32 %s22, 2
        // Predicated region
        $region73: #{tpu_custom_call.1} parent=71 // pred_check
          %p879 = pneg %p266
        $region74: #{tpu_custom_call.1} parent=71 // pred_check_branch
          %881 = sbr.rel (%p879) target = $region76
        $region75: #{tpu_custom_call.1} parent=71 // pred_region
          %s882 = sand.u32 %s251, 1
          %s883 = scalar_lea.sflag [#allocation4], %s882
          %s884 = sand.u32 %s251, 1
          %s885 = smul.addr %s884, 8
          %s886 = scalar_lea.vmem [#allocation3], %s885
          %887 = dma.done %s883, 128
        $region76: #{tpu_custom_call.1} parent=71 // pred_fallthru
          _
        // Predicated region
        $region77: #{tpu_custom_call.1} parent=71 // pred_check
          %p888 = pneg %p294
        $region78: #{tpu_custom_call.1} parent=71 // pred_check_branch
          %890 = sbr.rel (%p888) target = $region80
        $region79: #{tpu_custom_call.1} parent=71 // pred_region
          %s891 = sand.u32 %s279, 1
          %s892 = scalar_lea.sflag [#allocation6], %s891
          %s893 = sand.u32 %s279, 1
          %s894 = smul.addr %s893, 8
          %s895 = scalar_lea.vmem [#allocation5], %s894
          %896 = dma.done %s892, 128
        $region80: #{tpu_custom_call.1} parent=71 // pred_fallthru
          _
      $region72: #{tpu_custom_call.1} parent=5 // pred_fallthru
        _
    $region6: #{tpu_custom_call.1} parent=1 // loop_footer
      %s26 = sadd.s32 1, %s22
    $region7: #{tpu_custom_call.1} parent=1 // loop_footer_branch
      %21 = sbr.rel target = $region3
    $region8: #{tpu_custom_call.1} parent=1 // loop_exit
      _
    %897 = vsyncpa [#allocation4], 1
    %s898 = scalar_lea.sflag [#allocation4], 1
    %899 = vsyncpa %s898, 1
    %900 = vsyncpa [#allocation6], 1
    %s901 = scalar_lea.sflag [#allocation6], 1
    %902 = vsyncpa %s901, 1

</llo_original>
